<compile_context>
chip_gen: v7x
topology: tpu7x:2x2x1
jax: 0.10.0
libtpu: 0.0.40
codegen_flags: <defaults>
</compile_context>

<pallas_src>
import math
import functools

import jax
import jax.numpy as jnp
from jax import lax
from jax.experimental import pallas as pl
from jax.experimental.pallas import tpu as pltpu


def _round_up(x, m):
    return (x + m - 1) // m * m


def _vmem_limit(bytes_needed):
    """Computed scoped-VMEM limit: footprint * headroom, capped per generation."""
    try:
        phys = pltpu.get_tpu_info().vmem_capacity_bytes
    except Exception:
        phys = 64 * 1024 * 1024          # conservative (v7x per-TC)
    cap = (phys * 3) // 4                # leave headroom below the physical ceiling
    want = int(bytes_needed * 1.5)       # ~50% headroom over the static estimate
    floor = min(32 * 1024 * 1024, cap)
    return max(floor, min(cap, want))


# ----------------------------------------------------------------------------
# Pass 1: fused Q/K/V projection (runs once over the sequence)
# ----------------------------------------------------------------------------
def _qkv_proj_kernel(x_ref, w_ref, b_ref, q_ref, k_ref, v_ref, *, d_pad):
    # x bf16, fused weight bf16 (resident across the grid), f32 accumulate.
    qkv = jnp.dot(x_ref[...], w_ref[...],
                  preferred_element_type=jnp.float32) + b_ref[...]
    q_ref[...] = qkv[:, :d_pad].astype(jnp.bfloat16)          # already * 1/sqrt(d)
    k_ref[...] = qkv[:, d_pad:2 * d_pad].astype(jnp.bfloat16)
    v_ref[...] = qkv[:, 2 * d_pad:].astype(jnp.bfloat16)


# ----------------------------------------------------------------------------
# Pass 2: flash attention + residual + TF-style LayerNorm
# ----------------------------------------------------------------------------
def _flash_attn_ln_kernel(xres_ref, q_ref, k_ref, v_ref, kmask_ref,
                          gamma_ref, beta_ref, out_ref,
                          m_scr, l_scr, acc_scr,
                          *, d_valid, eps, use_mask):
    ki = pl.program_id(1)

    # ---- per-q-tile init of the online-softmax state ----
    @pl.when(ki == 0)
    def _init():
        m_scr[...] = jnp.full(m_scr.shape, -jnp.inf, jnp.float32)
        l_scr[...] = jnp.zeros(l_scr.shape, jnp.float32)
        acc_scr[...] = jnp.zeros(acc_scr.shape, jnp.float32)

    # ---- scores: contract last dims of pre-scaled bf16 q and bf16 k ----
    s = lax.dot_general(q_ref[...], k_ref[...], (((1,), (1,)), ((), ())),
                        preferred_element_type=jnp.float32)
    if use_mask:
        # (1, tk) row of 0 / -1e30; safe because the first kv tile always
        # contains at least one valid key, so the running max stays finite.
        s = s + kmask_ref[...]

    # ---- online softmax update (f32 on VPU/EUP) ----
    m_prev = m_scr[...]
    m_new = jnp.maximum(m_prev, s.max(-1, keepdims=True))
    alpha = jnp.exp(m_prev - m_new)
    p = jnp.exp(s - m_new)
    l_scr[...] = alpha * l_scr[...] + p.sum(-1, keepdims=True)
    acc_scr[...] = alpha * acc_scr[...] + jnp.dot(
        p.astype(jnp.bfloat16), v_ref[...], preferred_element_type=jnp.float32)
    m_scr[...] = m_new

    # ---- finalize (last kv step): residual + TF-style LayerNorm, write tile ----
    @pl.when(ki == pl.num_programs(1) - 1)
    def _finalize():
        ctx = acc_scr[...] * pl.reciprocal(l_scr[...], approx=True)
        h = ctx + xres_ref[...]                       # residual in f32
        inv_d = 1.0 / d_valid
        # padded feature columns of h are exactly 0 (zero-padded weights /
        # biases / x), so the mean needs no mask; the variance does.
        u = jnp.sum(h, axis=-1, keepdims=True) * inv_d
        lane = lax.broadcasted_iota(jnp.int32, h.shape, 1)
        dev = jnp.where(lane < d_valid, h - u, 0.0)
        var = jnp.sum(dev * dev, axis=-1, keepdims=True) * inv_d
        normed = dev * lax.rsqrt(var + eps)           # eps inside the sqrt (TF-style)
        out_ref[...] = (gamma_ref[...] * normed + beta_ref[...]).astype(out_ref.dtype)
        # NOTE: padded query rows flow through the LayerNorm with arbitrary
        # (finite) values and are sliced off by the wrapper.


def self_attention(x, params, *, eps=1e-12, block_q=256, block_k=512):
    """x: (N, D) float32. params: dict matching nn.Linear / LayerNorm weights."""
    n, d = x.shape
    f32, bf16 = jnp.float32, jnp.bfloat16

    d_pad = _round_up(d, 128)
    n_pad = _round_up(n, 128)
    # tile sizes must divide n_pad and be multiples of 128
    tk = min(block_k, n_pad)
    while n_pad % tk:
        tk -= 128
    tq = min(block_q, n_pad)
    while n_pad % tq:
        tq -= 128
    use_mask = (n != n_pad)
    scale = 1.0 / math.sqrt(d)

    # ---- padded / pre-cast operands ----------------------------------------
    x_p = jnp.zeros((n_pad, d_pad), f32).at[:n, :d].set(x.astype(f32))
    x_bf = x_p.astype(bf16)                           # matmul operand (prologue)

    wq = jnp.asarray(params["wq"], f32) * scale       # fold 1/sqrt(d) into Q proj
    bq = jnp.asarray(params["bq"], f32).reshape(1, -1) * scale
    wk = jnp.asarray(params["wk"], f32)
    bk = jnp.asarray(params["bk"], f32).reshape(1, -1)
    wv = jnp.asarray(params["wv"], f32)
    bv = jnp.asarray(params["bv"], f32).reshape(1, -1)

    w_qkv = (jnp.zeros((d_pad, 3 * d_pad), f32)
             .at[:d, :d].set(wq)
             .at[:d, d_pad:d_pad + d].set(wk)
             .at[:d, 2 * d_pad:2 * d_pad + d].set(wv)).astype(bf16)   # bf16 resident
    b_qkv = (jnp.zeros((1, 3 * d_pad), f32)
             .at[:, :d].set(bq)
             .at[:, d_pad:d_pad + d].set(bk)
             .at[:, 2 * d_pad:2 * d_pad + d].set(bv))                  # f32 bias add
    gamma_p = jnp.zeros((1, d_pad), f32).at[:, :d].set(
        jnp.asarray(params["ln_w"], f32).reshape(1, -1))
    beta_p = jnp.zeros((1, d_pad), f32).at[:, :d].set(
        jnp.asarray(params["ln_b"], f32).reshape(1, -1))
    # additive key-padding mask row: 0 for valid keys, -1e30 for padded keys
    kmask = jnp.where(jnp.arange(n_pad) < n, 0.0, -1e30).astype(f32).reshape(1, n_pad)

    # ---- pass 1: fused Q/K/V projection ------------------------------------
    tile_p = tq
    vmem_proj = (2 * tile_p * d_pad * 2              # x tile bf16 (dbl buffered)
                 + 2 * d_pad * 3 * d_pad * 2         # fused weight bf16
                 + 2 * 8 * 3 * d_pad * 4             # bias f32 (sublane-padded)
                 + 2 * 3 * tile_p * d_pad * 2)       # three bf16 output tiles
    proj_flops = 2 * n_pad * d_pad * 3 * d_pad
    proj_bytes = (n_pad * d_pad * 2 + d_pad * 3 * d_pad * 2
                  + 3 * d_pad * 4 + 3 * n_pad * d_pad * 2)

    q_bf, k_bf, v_bf = pl.pallas_call(
        functools.partial(_qkv_proj_kernel, d_pad=d_pad),
        out_shape=(jax.ShapeDtypeStruct((n_pad, d_pad), bf16),) * 3,
        grid_spec=pltpu.PrefetchScalarGridSpec(
            num_scalar_prefetch=0,
            grid=(n_pad // tile_p,),
            in_specs=[
                pl.BlockSpec((tile_p, d_pad), lambda i: (i, 0)),       # x rows (bf16)
                pl.BlockSpec((d_pad, 3 * d_pad), lambda i: (0, 0)),    # W_qkv (resident)
                pl.BlockSpec((1, 3 * d_pad), lambda i: (0, 0)),        # b_qkv
            ],
            out_specs=[
                pl.BlockSpec((tile_p, d_pad), lambda i: (i, 0)),
                pl.BlockSpec((tile_p, d_pad), lambda i: (i, 0)),
                pl.BlockSpec((tile_p, d_pad), lambda i: (i, 0)),
            ]),
        compiler_params=pltpu.CompilerParams(
            dimension_semantics=("parallel",),
            vmem_limit_bytes=_vmem_limit(vmem_proj)),
        cost_estimate=pl.CostEstimate(
            flops=proj_flops, transcendentals=0, bytes_accessed=proj_bytes),
    )(x_bf, w_qkv, b_qkv)

    # ---- pass 2: flash attention + residual + LayerNorm --------------------
    vmem_attn = (2 * tq * d_pad * 4                  # residual x tile f32
                 + 2 * tq * d_pad * 2                # q tile bf16
                 + 2 * 2 * tk * d_pad * 2            # k + v tiles bf16
                 + 2 * 8 * tk * 4                    # key mask row
                 + 2 * 2 * 8 * d_pad * 4             # gamma + beta
                 + 2 * tq * d_pad * 4                # output tile f32
                 + tq * d_pad * 4 + 2 * tq * 128 * 4)  # acc + m + l scratch
    attn_flops = 4 * n_pad * n_pad * d_pad
    attn_bytes = (n_pad * d_pad * (4 + 2)            # residual x + q
                  + 2 * (n_pad // tq) * n_pad * d_pad * 2   # k, v re-streamed per q tile
                  + n_pad * d_pad * 4)               # output

    grid = (n_pad // tq, n_pad // tk)
    out_pad = pl.pallas_call(
        functools.partial(_flash_attn_ln_kernel,
                          d_valid=d, eps=eps, use_mask=use_mask),
        out_shape=jax.ShapeDtypeStruct((n_pad, d_pad), x.dtype),
        grid_spec=pltpu.PrefetchScalarGridSpec(
            num_scalar_prefetch=0,
            grid=grid,
            in_specs=[
                pl.BlockSpec((tq, d_pad), lambda qi, ki: (qi, 0)),   # residual x (f32)
                pl.BlockSpec((tq, d_pad), lambda qi, ki: (qi, 0)),   # q (bf16, pre-scaled)
                pl.BlockSpec((tk, d_pad), lambda qi, ki: (ki, 0)),   # k (bf16)
                pl.BlockSpec((tk, d_pad), lambda qi, ki: (ki, 0)),   # v (bf16)
                pl.BlockSpec((1, tk), lambda qi, ki: (0, ki)),       # key-pad mask row
                pl.BlockSpec((1, d_pad), lambda qi, ki: (0, 0)),     # gamma
                pl.BlockSpec((1, d_pad), lambda qi, ki: (0, 0)),     # beta
            ],
            out_specs=pl.BlockSpec((tq, d_pad), lambda qi, ki: (qi, 0)),
            scratch_shapes=[
                pltpu.VMEM((tq, 1), jnp.float32),       # running max
                pltpu.VMEM((tq, 1), jnp.float32),       # running sum
                pltpu.VMEM((tq, d_pad), jnp.float32),   # context accumulator
            ]),
        compiler_params=pltpu.CompilerParams(
            dimension_semantics=("parallel", "arbitrary"),
            vmem_limit_bytes=_vmem_limit(vmem_attn)),
        cost_estimate=pl.CostEstimate(
            flops=attn_flops, transcendentals=n_pad * n_pad,
            bytes_accessed=attn_bytes),
    )(x_p, q_bf, k_bf, v_bf, kmask, gamma_p, beta_p)

    return out_pad[:n, :d]


def init_params(key, d):
    """Deterministic synthetic parameters matching SelfAttention.__init__."""
    ks = jax.random.split(key, 6)
    scale = 1.0 / math.sqrt(d)
    # nn.Linear stores weight as (out, in); pre-transposed to (in, out) for x @ W.
    wq = jax.random.uniform(ks[0], (d, d), jnp.float32, -scale, scale)
    wk = jax.random.uniform(ks[1], (d, d), jnp.float32, -scale, scale)
    wv = jax.random.uniform(ks[2], (d, d), jnp.float32, -scale, scale)
    bq = jax.random.uniform(ks[3], (1, d), jnp.float32, -scale, scale)
    bk = jax.random.uniform(ks[4], (1, d), jnp.float32, -scale, scale)
    bv = jax.random.uniform(ks[5], (1, d), jnp.float32, -scale, scale)
    return {
        "wq": wq, "bq": bq,
        "wk": wk, "bk": bk,
        "wv": wv, "bv": bv,
        "ln_w": jnp.ones((1, d), jnp.float32),   # LayerNorm.weight = ones
        "ln_b": jnp.zeros((1, d), jnp.float32),  # LayerNorm.bias  = zeros
    }


def self_attention_ref(x, p, eps=1e-12):
    q = x @ p["wq"] + p["bq"]
    k = x @ p["wk"] + p["bk"]
    v = x @ p["wv"] + p["bv"]
    scores = (q @ k.T) / math.sqrt(x.shape[-1])
    probs = jax.nn.softmax(scores, axis=-1)
    h = probs @ v + x
    u = h.mean(-1, keepdims=True)
    s = ((h - u) ** 2).mean(-1, keepdims=True)
    return p["ln_w"] * ((h - u) / jnp.sqrt(s + eps)) + p["ln_b"]


if __name__ == "__main__":
    key = jax.random.PRNGKey(0)
    k_x, k_p = jax.random.split(key)

    N, D = 8, 32          # seq=8 tokens, hidden=32 features (padded to 128x128)
    x = jax.random.normal(k_x, (N, D), jnp.float32)
    params = init_params(k_p, D)

    out = jax.block_until_ready(self_attention(x, params))
    ref = self_attention_ref(x, params)

    assert out.shape == (N, D)
    err = float(jnp.max(jnp.abs(out - ref)))
    # bf16 MXU operands + approx EUP reciprocal => relaxed tolerance vs f32 ref
    assert err < 1e-1, f"mismatch vs reference: max abs err {err}"

    print("KERNEL_OK")
</pallas_src>

<mosaic_0001>
module attributes {stable_mosaic.version = 11 : i64} {
  func.func @_qkv_proj_kernel(%arg0: i32, %arg1: memref<128x128xbf16, #tpu.memory_space<vmem>>, %arg2: memref<128x384xbf16, #tpu.memory_space<vmem>>, %arg3: memref<1x384xf32, #tpu.memory_space<vmem>>, %arg4: memref<128x128xbf16, #tpu.memory_space<vmem>>, %arg5: memref<128x128xbf16, #tpu.memory_space<vmem>>, %arg6: memref<128x128xbf16, #tpu.memory_space<vmem>>) attributes {dimension_semantics = [#tpu.dimension_semantics<parallel>], iteration_bounds = array<i64: 1>, scalar_prefetch = 0 : i64, scratch_operands = 0 : i64, tpu.core_type = #tpu.core_type<tc>, window_params = [{transform_indices = @transform_0, window_bounds = array<i64: 128, 128>}, {pipeline_mode = #tpu.pipeline_mode<synchronous>, transform_indices = @transform_1, window_bounds = array<i64: 128, 384>}, {pipeline_mode = #tpu.pipeline_mode<synchronous>, transform_indices = @transform_2, window_bounds = array<i64: 1, 384>}, {transform_indices = @transform_3, window_bounds = array<i64: 128, 128>}, {transform_indices = @transform_4, window_bounds = array<i64: 128, 128>}, {transform_indices = @transform_5, window_bounds = array<i64: 128, 128>}]} {
    %c0 = arith.constant 0 : index
    %c0_0 = arith.constant 0 : index
    %0 = vector.load %arg1[%c0, %c0_0] : memref<128x128xbf16, #tpu.memory_space<vmem>>, vector<128x128xbf16>
    %c0_1 = arith.constant 0 : index
    %c0_2 = arith.constant 0 : index
    %1 = vector.load %arg2[%c0_1, %c0_2] : memref<128x384xbf16, #tpu.memory_space<vmem>>, vector<128x384xbf16>
    %cst = arith.constant dense<0.000000e+00> : vector<128x384xf32>
    %2 = tpu.matmul %0, %1, %cst {dimension_numbers = #tpu.dot_dimension_numbers<[1], [0], [0], [1], [0, 0, 1, 1], [], []>} : vector<128x128xbf16>, vector<128x384xbf16>, vector<128x384xf32> -> vector<128x384xf32>
    %c0_3 = arith.constant 0 : index
    %c0_4 = arith.constant 0 : index
    %3 = vector.load %arg3[%c0_3, %c0_4] : memref<1x384xf32, #tpu.memory_space<vmem>>, vector<1x384xf32>
    %4 = vector.broadcast %3 : vector<1x384xf32> to vector<128x384xf32>
    %5 = arith.addf %2, %4 : vector<128x384xf32>
    %6 = vector.extract_strided_slice %5 {offsets = [0, 0], sizes = [128, 128], strides = [1, 1]} : vector<128x384xf32> to vector<128x128xf32>
    %7 = arith.truncf %6 : vector<128x128xf32> to vector<128x128xbf16>
    %c0_5 = arith.constant 0 : index
    %c0_6 = arith.constant 0 : index
    %8 = vector.load %arg4[%c0_5, %c0_6] : memref<128x128xbf16, #tpu.memory_space<vmem>>, vector<128x128xbf16>
    tpu.vector_store %arg4[%c0_5, %c0_6], %7 {strides = array<i32>} : memref<128x128xbf16, #tpu.memory_space<vmem>>, vector<128x128xbf16>,
    %9 = vector.extract_strided_slice %5 {offsets = [0, 128], sizes = [128, 128], strides = [1, 1]} : vector<128x384xf32> to vector<128x128xf32>
    %10 = arith.truncf %9 : vector<128x128xf32> to vector<128x128xbf16>
    %c0_7 = arith.constant 0 : index
    %c0_8 = arith.constant 0 : index
    %11 = vector.load %arg5[%c0_7, %c0_8] : memref<128x128xbf16, #tpu.memory_space<vmem>>, vector<128x128xbf16>
    tpu.vector_store %arg5[%c0_7, %c0_8], %10 {strides = array<i32>} : memref<128x128xbf16, #tpu.memory_space<vmem>>, vector<128x128xbf16>,
    %12 = vector.extract_strided_slice %5 {offsets = [0, 256], sizes = [128, 128], strides = [1, 1]} : vector<128x384xf32> to vector<128x128xf32>
    %13 = arith.truncf %12 : vector<128x128xf32> to vector<128x128xbf16>
    %c0_9 = arith.constant 0 : index
    %c0_10 = arith.constant 0 : index
    %14 = vector.load %arg6[%c0_9, %c0_10] : memref<128x128xbf16, #tpu.memory_space<vmem>>, vector<128x128xbf16>
    tpu.vector_store %arg6[%c0_9, %c0_10], %13 {strides = array<i32>} : memref<128x128xbf16, #tpu.memory_space<vmem>>, vector<128x128xbf16>,
    return
  }
  func.func @transform_0(%arg0: i32) -> (i32, i32) {
    %c0_i32 = arith.constant 0 : i32
    %c0_i32_0 = arith.constant 0 : i32
    return %arg0, %c0_i32 : i32, i32
  }
  func.func @transform_1(%arg0: i32) -> (i32, i32) {
    %c0_i32 = arith.constant 0 : i32
    %c0_i32_0 = arith.constant 0 : i32
    %c0_i32_1 = arith.constant 0 : i32
    return %c0_i32, %c0_i32_0 : i32, i32
  }
  func.func @transform_2(%arg0: i32) -> (i32, i32) {
    %c0_i32 = arith.constant 0 : i32
    %c0_i32_0 = arith.constant 0 : i32
    %c0_i32_1 = arith.constant 0 : i32
    return %c0_i32, %c0_i32_0 : i32, i32
  }
  func.func @transform_3(%arg0: i32) -> (i32, i32) {
    %c0_i32 = arith.constant 0 : i32
    %c0_i32_0 = arith.constant 0 : i32
    return %arg0, %c0_i32 : i32, i32
  }
  func.func @transform_4(%arg0: i32) -> (i32, i32) {
    %c0_i32 = arith.constant 0 : i32
    %c0_i32_0 = arith.constant 0 : i32
    return %arg0, %c0_i32 : i32, i32
  }
  func.func @transform_5(%arg0: i32) -> (i32, i32) {
    %c0_i32 = arith.constant 0 : i32
    %c0_i32_0 = arith.constant 0 : i32
    return %arg0, %c0_i32 : i32, i32
  }
}

</mosaic_0001>

<llo_original>
// kernel: tpu_custom_call.1
$region0: #{tpu_custom_call.1}
  #allocation0 [shape = 'u32[]', space=smem, size = 0x4, offset = 0x4, fixed_abs, tag = 'smem constant byte address 0x4 - core index']
  #allocation1 [shape = 'u32[144,128]{1,0:T(1,128)}', space=vmem, size = 0x12000, scoped, tag = 'internal scratch']
  %s0 = inlined_call_operand.hbm [shape: bf16[128,128], index: 0, kind: input, shape index: {}]
  %s1 = inlined_call_operand.hbm [shape: bf16[128,384], index: 1, kind: input, shape index: {}]
  %s2 = inlined_call_operand.vmem [shape: f32[1,384], index: 2, kind: input, shape index: {}]
  %s3 = inlined_call_operand.hbm [shape: bf16[128,128], index: 3, kind: output, shape index: {0}]
  %s4 = inlined_call_operand.hbm [shape: bf16[128,128], index: 4, kind: output, shape index: {1}]
  %s5 = inlined_call_operand.hbm [shape: bf16[128,128], index: 5, kind: output, shape index: {2}]
  %6 = xla_tuple %s3, %s4, %s5
  %s7 = sld [smem:[#allocation0]]
  $region46: #{tpu_custom_call.1} parent=0
    _
  %s9 = ssub.s32 1, %s7
  %s10 = scalar_select 0, %s9, %s7
  $region1: #{tpu_custom_call.1} parent=0
    #allocation2 [shape = 'u8[32768]{0}', space=vmem, size = 0x8000, scoped, tag = 'input window, operand 0, single buffered']
    #allocation3 [shape = 's32[1]{0}', space=sflag, size = 0x4, scoped, tag = 'scoped memory for tpu_custom_call.1']
    #allocation4 [shape = 's32[1]{0}', space=sflag, size = 0x4, scoped, tag = 'scoped memory for tpu_custom_call.1']
    #allocation5 [shape = 'u8[98304]{0}', space=vmem, size = 0x18000, scoped, tag = 'input window, operand 1, single buffered']
    #allocation6 [shape = 's32[1]{0}', space=sflag, size = 0x4, scoped, tag = 'scoped memory for tpu_custom_call.1']
    #allocation7 [shape = 'u8[32768]{0}', space=vmem, size = 0x8000, scoped, tag = 'output window, operand 0, single buffered']
    #allocation8 [shape = 'u8[32768]{0}', space=vmem, size = 0x8000, scoped, tag = 'output window, operand 1, single buffered']
    #allocation9 [shape = 's32[1]{0}', space=sflag, size = 0x4, scoped, tag = 'scoped memory for tpu_custom_call.1']
    #allocation10 [shape = 'u8[32768]{0}', space=vmem, size = 0x8000, scoped, tag = 'output window, operand 2, single buffered']
    %11 = vsyncpa [#allocation3], 0
    %12 = vsyncpa [#allocation6], 0
    %13 = vsyncpa [#allocation4], 0
    %14 = vsyncpa [#allocation9], 0
    // Predicated region
    $region2: #{tpu_custom_call.1} parent=1 // pred_check
      _
    $region3: #{tpu_custom_call.1} parent=1 // pred_check_branch
      %16 = sbr.rel (0) target = $region5
    $region4: #{tpu_custom_call.1} parent=1 // pred_region
      %s18 = ssub.s32 1024, 1024
      %19 = vsyncadd [#allocation3], %s18
      %s20 = sshll.u32 [#allocation2], 4
      %s21 = int_to_ptr.vmem [resolvable:$true] %s20
      %26 = dma.hbm_to_vmem [thread:$0]  %s0, 1024, %s21, [#allocation3], 64, 64, 4
    $region5: #{tpu_custom_call.1} parent=1 // pred_fallthru
      _
    // Predicated region
    $region6: #{tpu_custom_call.1} parent=1 // pred_check
      _
    $region7: #{tpu_custom_call.1} parent=1 // pred_check_branch
      %28 = sbr.rel (0) target = $region9
    $region8: #{tpu_custom_call.1} parent=1 // pred_region
      %s30 = ssub.s32 3072, 3072
      %31 = vsyncadd [#allocation6], %s30
      %s32 = sshll.u32 [#allocation5], 4
      %s33 = int_to_ptr.vmem [resolvable:$true] %s32
      %38 = dma.hbm_to_vmem [thread:$0]  %s1, 3072, %s33, [#allocation6], 192, 192, 12
    $region9: #{tpu_custom_call.1} parent=1 // pred_fallthru
      _
    // Predicated region
    $region10: #{tpu_custom_call.1} parent=1 // pred_check
      _
    $region11: #{tpu_custom_call.1} parent=1 // pred_check_branch
      %40 = sbr.rel (0) target = $region13
    $region12: #{tpu_custom_call.1} parent=1 // pred_region
      _
    $region13: #{tpu_custom_call.1} parent=1 // pred_fallthru
      _
    // Predicated region
    $region14: #{tpu_custom_call.1} parent=1 // pred_check
      _
    $region15: #{tpu_custom_call.1} parent=1 // pred_check_branch
      %42 = sbr.rel (0) target = $region17
    $region16: #{tpu_custom_call.1} parent=1 // pred_region
      %43 = dma.done [#allocation3], 1024
    $region17: #{tpu_custom_call.1} parent=1 // pred_fallthru
      _
    // Predicated region
    $region18: #{tpu_custom_call.1} parent=1 // pred_check
      _
    $region19: #{tpu_custom_call.1} parent=1 // pred_check_branch
      %45 = sbr.rel (0) target = $region21
    $region20: #{tpu_custom_call.1} parent=1 // pred_region
      %46 = dma.done [#allocation6], 3072
    $region21: #{tpu_custom_call.1} parent=1 // pred_fallthru
      _
    %v48 = vld [vmem:[#allocation2] sm:$0xf]
    %v49 = vld [vmem:[#allocation2 + $0x4] sm:$0xf]
    %v50 = vld [vmem:[#allocation2 + $0x8] sm:$0xf]
    %v51 = vld [vmem:[#allocation2 + $0xc] sm:$0xf]
    %v52 = vld [vmem:[#allocation2 + $0x10] sm:$0xf]
    %v53 = vld [vmem:[#allocation2 + $0x14] sm:$0xf]
    %v54 = vld [vmem:[#allocation2 + $0x18] sm:$0xf]
    %v55 = vld [vmem:[#allocation2 + $0x1c] sm:$0xf]
    %v56 = vld [vmem:[#allocation2 + $0x20] sm:$0xf]
    %v57 = vld [vmem:[#allocation2 + $0x24] sm:$0xf]
    %v58 = vld [vmem:[#allocation2 + $0x28] sm:$0xf]
    %v59 = vld [vmem:[#allocation2 + $0x2c] sm:$0xf]
    %v60 = vld [vmem:[#allocation2 + $0x30] sm:$0xf]
    %v61 = vld [vmem:[#allocation2 + $0x34] sm:$0xf]
    %v62 = vld [vmem:[#allocation2 + $0x38] sm:$0xf]
    %v63 = vld [vmem:[#allocation2 + $0x3c] sm:$0xf]
    %v64 = vld [vmem:[#allocation5] sm:$0xff]
    %v65 = vld [vmem:[#allocation5 + $0x8] sm:$0xf]
    %v66 = vld [vmem:[#allocation5 + $0xc] sm:$0xff]
    %v67 = vld [vmem:[#allocation5 + $0x14] sm:$0xf]
    %v68 = vld [vmem:[#allocation5 + $0x18] sm:$0xff]
    %v69 = vld [vmem:[#allocation5 + $0x20] sm:$0xf]
    %v70 = vld [vmem:[#allocation5 + $0x24] sm:$0xff]
    %v71 = vld [vmem:[#allocation5 + $0x2c] sm:$0xf]
    %v72 = vld [vmem:[#allocation5 + $0x30] sm:$0xff]
    %v73 = vld [vmem:[#allocation5 + $0x38] sm:$0xf]
    %v74 = vld [vmem:[#allocation5 + $0x3c] sm:$0xff]
    %v75 = vld [vmem:[#allocation5 + $0x44] sm:$0xf]
    %v76 = vld [vmem:[#allocation5 + $0x48] sm:$0xff]
    %v77 = vld [vmem:[#allocation5 + $0x50] sm:$0xf]
    %v78 = vld [vmem:[#allocation5 + $0x54] sm:$0xff]
    %v79 = vld [vmem:[#allocation5 + $0x5c] sm:$0xf]
    %v80 = vld [vmem:[#allocation5 + $0x60] sm:$0xff]
    %v81 = vld [vmem:[#allocation5 + $0x68] sm:$0xf]
    %v82 = vld [vmem:[#allocation5 + $0x6c] sm:$0xff]
    %v83 = vld [vmem:[#allocation5 + $0x74] sm:$0xf]
    %v84 = vld [vmem:[#allocation5 + $0x78] sm:$0xff]
    %v85 = vld [vmem:[#allocation5 + $0x80] sm:$0xf]
    %v86 = vld [vmem:[#allocation5 + $0x84] sm:$0xff]
    %v87 = vld [vmem:[#allocation5 + $0x8c] sm:$0xf]
    %v88 = vld [vmem:[#allocation5 + $0x90] sm:$0xff]
    %v89 = vld [vmem:[#allocation5 + $0x98] sm:$0xf]
    %v90 = vld [vmem:[#allocation5 + $0x9c] sm:$0xff]
    %v91 = vld [vmem:[#allocation5 + $0xa4] sm:$0xf]
    %v92 = vld [vmem:[#allocation5 + $0xa8] sm:$0xff]
    %v93 = vld [vmem:[#allocation5 + $0xb0] sm:$0xf]
    %v94 = vld [vmem:[#allocation5 + $0xb4] sm:$0xff]
    %v95 = vld [vmem:[#allocation5 + $0xbc] sm:$0xf]
    %v96 = vld [vmem:[%s2] sm:$0x7]
    %v98 = vlaneseq
    %v99 = vshrl.u32 %v98, 7
    %v100 = vsub.s32 0, %v99
    %v101 = vrot.slane %v96, %v100
    %v102 = vlaneseq
    %v103 = vshrl.u32 %v102, 7
    %v104 = vsub.s32 1, %v103
    %v105 = vrot.slane %v96, %v104
    %v106 = vlaneseq
    %v107 = vshrl.u32 %v106, 7
    %v108 = vsub.s32 2, %v107
    %v109 = vrot.slane %v96, %v108
    %v129 = vunpack.c.l.b16 %v48
    %v130 = vunpack.c.l.b16 %v49
    %v131 = vunpack.c.l.b16 %v50
    %v132 = vunpack.c.l.b16 %v51
    %v133 = vunpack.c.l.b16 %v52
    %v134 = vunpack.c.l.b16 %v53
    %v135 = vunpack.c.l.b16 %v54
    %v136 = vunpack.c.l.b16 %v55
    %v137 = vunpack.c.l.b16 %v56
    %v138 = vunpack.c.l.b16 %v57
    %v139 = vunpack.c.l.b16 %v58
    %v140 = vunpack.c.l.b16 %v59
    %v141 = vunpack.c.l.b16 %v60
    %v142 = vunpack.c.l.b16 %v61
    %v143 = vunpack.c.l.b16 %v62
    %v144 = vunpack.c.l.b16 %v63
    %v145 = vpack.c.b16 %v130, %v129
    %v146 = vpack.c.b16 %v132, %v131
    %v147 = vpack.c.b16 %v134, %v133
    %v148 = vpack.c.b16 %v136, %v135
    %v149 = vpack.c.b16 %v138, %v137
    %v150 = vpack.c.b16 %v140, %v139
    %v151 = vpack.c.b16 %v142, %v141
    %v152 = vpack.c.b16 %v144, %v143
    %v193 = vunpack.c.l.b16 %v64
    %v194 = vunpack.c.h.b16 %v64
    %v195 = vunpack.c.l.b16 %v65
    %v196 = vunpack.c.l.b16 %v66
    %v197 = vunpack.c.h.b16 %v66
    %v198 = vunpack.c.l.b16 %v67
    %v199 = vunpack.c.l.b16 %v68
    %v200 = vunpack.c.h.b16 %v68
    %v201 = vunpack.c.l.b16 %v69
    %v202 = vunpack.c.l.b16 %v70
    %v203 = vunpack.c.h.b16 %v70
    %v204 = vunpack.c.l.b16 %v71
    %v205 = vunpack.c.l.b16 %v72
    %v206 = vunpack.c.h.b16 %v72
    %v207 = vunpack.c.l.b16 %v73
    %v208 = vunpack.c.l.b16 %v74
    %v209 = vunpack.c.h.b16 %v74
    %v210 = vunpack.c.l.b16 %v75
    %v211 = vunpack.c.l.b16 %v76
    %v212 = vunpack.c.h.b16 %v76
    %v213 = vunpack.c.l.b16 %v77
    %v214 = vunpack.c.l.b16 %v78
    %v215 = vunpack.c.h.b16 %v78
    %v216 = vunpack.c.l.b16 %v79
    %v217 = vunpack.c.l.b16 %v80
    %v218 = vunpack.c.h.b16 %v80
    %v219 = vunpack.c.l.b16 %v81
    %v220 = vunpack.c.l.b16 %v82
    %v221 = vunpack.c.h.b16 %v82
    %v222 = vunpack.c.l.b16 %v83
    %v223 = vunpack.c.l.b16 %v84
    %v224 = vunpack.c.h.b16 %v84
    %v225 = vunpack.c.l.b16 %v85
    %v226 = vunpack.c.l.b16 %v86
    %v227 = vunpack.c.h.b16 %v86
    %v228 = vunpack.c.l.b16 %v87
    %v229 = vunpack.c.l.b16 %v88
    %v230 = vunpack.c.h.b16 %v88
    %v231 = vunpack.c.l.b16 %v89
    %v232 = vunpack.c.l.b16 %v90
    %v233 = vunpack.c.h.b16 %v90
    %v234 = vunpack.c.l.b16 %v91
    %v235 = vunpack.c.l.b16 %v92
    %v236 = vunpack.c.h.b16 %v92
    %v237 = vunpack.c.l.b16 %v93
    %v238 = vunpack.c.l.b16 %v94
    %v239 = vunpack.c.h.b16 %v94
    %v240 = vunpack.c.l.b16 %v95
    %v241 = vpack.c.b16 %v196, %v193
    %v242 = vpack.c.b16 %v197, %v194
    %v243 = vpack.c.b16 %v198, %v195
    %v244 = vpack.c.b16 %v202, %v199
    %v245 = vpack.c.b16 %v203, %v200
    %v246 = vpack.c.b16 %v204, %v201
    %v247 = vpack.c.b16 %v208, %v205
    %v248 = vpack.c.b16 %v209, %v206
    %v249 = vpack.c.b16 %v210, %v207
    %v250 = vpack.c.b16 %v214, %v211
    %v251 = vpack.c.b16 %v215, %v212
    %v252 = vpack.c.b16 %v216, %v213
    %v253 = vpack.c.b16 %v220, %v217
    %v254 = vpack.c.b16 %v221, %v218
    %v255 = vpack.c.b16 %v222, %v219
    %v256 = vpack.c.b16 %v226, %v223
    %v257 = vpack.c.b16 %v227, %v224
    %v258 = vpack.c.b16 %v228, %v225
    %v259 = vpack.c.b16 %v232, %v229
    %v260 = vpack.c.b16 %v233, %v230
    %v261 = vpack.c.b16 %v234, %v231
    %v262 = vpack.c.b16 %v238, %v235
    %v263 = vpack.c.b16 %v239, %v236
    %v264 = vpack.c.b16 %v240, %v237
    %289 = vmatprep.subr.bf16.mxu0 %v242
    %290 = vmatpush1.bf16.msra.mxu0 %v241
    %291 = vmatprep.subr.bf16.mxu0 %v245
    %292 = vmatpush1.bf16.msra.mxu0 %v244
    %293 = vmatprep.subr.bf16.mxu0 %v248
    %294 = vmatpush1.bf16.msra.mxu0 %v247
    %295 = vmatprep.subr.bf16.mxu0 %v251
    %296 = vmatpush1.bf16.msra.mxu0 %v250
    %297 = vmatprep.subr.bf16.mxu0 %v254
    %298 = vmatpush1.bf16.msra.mxu0 %v253
    %299 = vmatprep.subr.bf16.mxu0 %v257
    %300 = vmatpush1.bf16.msra.mxu0 %v256
    %301 = vmatprep.subr.bf16.mxu0 %v260
    %302 = vmatpush1.bf16.msra.mxu0 %v259
    %303 = vmatprep.subr.bf16.mxu0 %v263
    %304 = vmatpush1.bf16.msra.mxu0 %v262
    %305 = vmatprep.subr.bf16.mxu0 0
    %306 = vmatpush1.bf16.msra.mxu0 0
    %307 = vmatprep.subr.bf16.mxu0 0
    %308 = vmatpush1.bf16.msra.mxu0 0
    %309 = vmatprep.subr.bf16.mxu0 0
    %310 = vmatpush1.bf16.msra.mxu0 0
    %311 = vmatprep.subr.bf16.mxu0 0
    %312 = vmatpush1.bf16.msra.mxu0 0
    %313 = vmatprep.subr.bf16.mxu0 0
    %314 = vmatpush1.bf16.msra.mxu0 0
    %315 = vmatprep.subr.bf16.mxu0 0
    %316 = vmatpush1.bf16.msra.mxu0 0
    %317 = vmatprep.subr.bf16.mxu0 0
    %318 = vmatpush1.bf16.msra.mxu0 0
    %319 = vmatprep.subr.bf16.mxu0 0
    %320 = vmatpush1.bf16.msra.mxu0 0
    %321 = vmatprep.mubr.bf16.mxu0 0
    %322 = vmatmul.mubr.bf16.gmra.mrb[0].mxu0 %v145
    %v323 = vpop.f32.mrb[0].mxu0
    %v324 = vadd.f32 %v101, %v323
    %v325 = vpop.f32.mrb[0].mxu0
    %v326 = vadd.f32 %v105, %v325
    %v327 = vpop.f32.mrb[0].mxu0
    %v328 = vadd.f32 %v101, %v327
    %v329 = vpop.f32.mrb[0].mxu0
    %v330 = vadd.f32 %v105, %v329
    %331 = vmatprep.mubr.bf16.mxu0 0
    %332 = vmatmul.mubr.bf16.gmra.mrb[0].mxu0 %v146
    %v333 = vpop.f32.mrb[0].mxu0
    %v334 = vadd.f32 %v101, %v333
    %v335 = vpop.f32.mrb[0].mxu0
    %v336 = vadd.f32 %v105, %v335
    %v337 = vpop.f32.mrb[0].mxu0
    %v338 = vadd.f32 %v101, %v337
    %v339 = vpop.f32.mrb[0].mxu0
    %v340 = vadd.f32 %v105, %v339
    %341 = vmatprep.mubr.bf16.mxu0 0
    %342 = vmatmul.mubr.bf16.gmra.mrb[0].mxu0 %v147
    %v343 = vpop.f32.mrb[0].mxu0
    %v344 = vadd.f32 %v101, %v343
    %v345 = vpop.f32.mrb[0].mxu0
    %v346 = vadd.f32 %v105, %v345
    %v347 = vpop.f32.mrb[0].mxu0
    %v348 = vadd.f32 %v101, %v347
    %v349 = vpop.f32.mrb[0].mxu0
    %v350 = vadd.f32 %v105, %v349
    %351 = vmatprep.mubr.bf16.mxu0 0
    %352 = vmatmul.mubr.bf16.gmra.mrb[0].mxu0 %v148
    %v353 = vpop.f32.mrb[0].mxu0
    %v354 = vadd.f32 %v101, %v353
    %v355 = vpop.f32.mrb[0].mxu0
    %v356 = vadd.f32 %v105, %v355
    %v357 = vpop.f32.mrb[0].mxu0
    %v358 = vadd.f32 %v101, %v357
    %v359 = vpop.f32.mrb[0].mxu0
    %v360 = vadd.f32 %v105, %v359
    %361 = vmatprep.mubr.bf16.mxu0 0
    %362 = vmatmul.mubr.bf16.gmra.mrb[0].mxu0 %v149
    %v363 = vpop.f32.mrb[0].mxu0
    %v364 = vadd.f32 %v101, %v363
    %v365 = vpop.f32.mrb[0].mxu0
    %v366 = vadd.f32 %v105, %v365
    %v367 = vpop.f32.mrb[0].mxu0
    %v368 = vadd.f32 %v101, %v367
    %v369 = vpop.f32.mrb[0].mxu0
    %v370 = vadd.f32 %v105, %v369
    %371 = vmatprep.mubr.bf16.mxu0 0
    %372 = vmatmul.mubr.bf16.gmra.mrb[0].mxu0 %v150
    %v373 = vpop.f32.mrb[0].mxu0
    %v374 = vadd.f32 %v101, %v373
    %v375 = vpop.f32.mrb[0].mxu0
    %v376 = vadd.f32 %v105, %v375
    %v377 = vpop.f32.mrb[0].mxu0
    %v378 = vadd.f32 %v101, %v377
    %v379 = vpop.f32.mrb[0].mxu0
    %v380 = vadd.f32 %v105, %v379
    %381 = vmatprep.mubr.bf16.mxu0 0
    %382 = vmatmul.mubr.bf16.gmra.mrb[0].mxu0 %v151
    %v383 = vpop.f32.mrb[0].mxu0
    %v384 = vadd.f32 %v101, %v383
    %v385 = vpop.f32.mrb[0].mxu0
    %v386 = vadd.f32 %v105, %v385
    %v387 = vpop.f32.mrb[0].mxu0
    %v388 = vadd.f32 %v101, %v387
    %v389 = vpop.f32.mrb[0].mxu0
    %v390 = vadd.f32 %v105, %v389
    %391 = vmatprep.mubr.bf16.mxu0 0
    %392 = vmatmul.mubr.bf16.gmra.mrb[0].mxu0 %v152
    %v393 = vpop.f32.mrb[0].mxu0
    %v394 = vadd.f32 %v101, %v393
    %v395 = vpop.f32.mrb[0].mxu0
    %v396 = vadd.f32 %v105, %v395
    %v397 = vpop.f32.mrb[0].mxu0
    %v398 = vadd.f32 %v101, %v397
    %v399 = vpop.f32.mrb[0].mxu0
    %v400 = vadd.f32 %v105, %v399
    %401 = vdwg.mxu0
    %402 = vmatprep.subr.bf16.mxu0 0
    %403 = vmatpush1.bf16.msra.mxu0 %v243
    %404 = vmatprep.subr.bf16.mxu0 0
    %405 = vmatpush1.bf16.msra.mxu0 %v246
    %406 = vmatprep.subr.bf16.mxu0 0
    %407 = vmatpush1.bf16.msra.mxu0 %v249
    %408 = vmatprep.subr.bf16.mxu0 0
    %409 = vmatpush1.bf16.msra.mxu0 %v252
    %410 = vmatprep.subr.bf16.mxu0 0
    %411 = vmatpush1.bf16.msra.mxu0 %v255
    %412 = vmatprep.subr.bf16.mxu0 0
    %413 = vmatpush1.bf16.msra.mxu0 %v258
    %414 = vmatprep.subr.bf16.mxu0 0
    %415 = vmatpush1.bf16.msra.mxu0 %v261
    %416 = vmatprep.subr.bf16.mxu0 0
    %417 = vmatpush1.bf16.msra.mxu0 %v264
    %418 = vmatprep.subr.bf16.mxu0 0
    %419 = vmatpush1.bf16.msra.mxu0 0
    %420 = vmatprep.subr.bf16.mxu0 0
    %421 = vmatpush1.bf16.msra.mxu0 0
    %422 = vmatprep.subr.bf16.mxu0 0
    %423 = vmatpush1.bf16.msra.mxu0 0
    %424 = vmatprep.subr.bf16.mxu0 0
    %425 = vmatpush1.bf16.msra.mxu0 0
    %426 = vmatprep.subr.bf16.mxu0 0
    %427 = vmatpush1.bf16.msra.mxu0 0
    %428 = vmatprep.subr.bf16.mxu0 0
    %429 = vmatpush1.bf16.msra.mxu0 0
    %430 = vmatprep.subr.bf16.mxu0 0
    %431 = vmatpush1.bf16.msra.mxu0 0
    %432 = vmatprep.subr.bf16.mxu0 0
    %433 = vmatpush1.bf16.msra.mxu0 0
    %434 = vmatprep.mubr.bf16.mxu0 0
    %435 = vmatmul.mubr.bf16.gmra.mrb[0].mxu0 %v145
    %v436 = vpop.f32.mrb[0].mxu0
    %v437 = vadd.f32 %v109, %v436
    %v438 = vpop.f32.mrb[0].mxu0
    %v439 = vpop.f32.mrb[0].mxu0
    %v440 = vadd.f32 %v109, %v439
    %v441 = vpop.f32.mrb[0].mxu0
    %442 = vmatprep.mubr.bf16.mxu0 0
    %443 = vmatmul.mubr.bf16.gmra.mrb[0].mxu0 %v146
    %v444 = vpop.f32.mrb[0].mxu0
    %v445 = vadd.f32 %v109, %v444
    %v446 = vpop.f32.mrb[0].mxu0
    %v447 = vpop.f32.mrb[0].mxu0
    %v448 = vadd.f32 %v109, %v447
    %v449 = vpop.f32.mrb[0].mxu0
    %450 = vmatprep.mubr.bf16.mxu0 0
    %451 = vmatmul.mubr.bf16.gmra.mrb[0].mxu0 %v147
    %v452 = vpop.f32.mrb[0].mxu0
    %v453 = vadd.f32 %v109, %v452
    %v454 = vpop.f32.mrb[0].mxu0
    %v455 = vpop.f32.mrb[0].mxu0
    %v456 = vadd.f32 %v109, %v455
    %v457 = vpop.f32.mrb[0].mxu0
    %458 = vmatprep.mubr.bf16.mxu0 0
    %459 = vmatmul.mubr.bf16.gmra.mrb[0].mxu0 %v148
    %v460 = vpop.f32.mrb[0].mxu0
    %v461 = vadd.f32 %v109, %v460
    %v462 = vpop.f32.mrb[0].mxu0
    %v463 = vpop.f32.mrb[0].mxu0
    %v464 = vadd.f32 %v109, %v463
    %v465 = vpop.f32.mrb[0].mxu0
    %466 = vmatprep.mubr.bf16.mxu0 0
    %467 = vmatmul.mubr.bf16.gmra.mrb[0].mxu0 %v149
    %v468 = vpop.f32.mrb[0].mxu0
    %v469 = vadd.f32 %v109, %v468
    %v470 = vpop.f32.mrb[0].mxu0
    %v471 = vpop.f32.mrb[0].mxu0
    %v472 = vadd.f32 %v109, %v471
    %v473 = vpop.f32.mrb[0].mxu0
    %474 = vmatprep.mubr.bf16.mxu0 0
    %475 = vmatmul.mubr.bf16.gmra.mrb[0].mxu0 %v150
    %v476 = vpop.f32.mrb[0].mxu0
    %v477 = vadd.f32 %v109, %v476
    %v478 = vpop.f32.mrb[0].mxu0
    %v479 = vpop.f32.mrb[0].mxu0
    %v480 = vadd.f32 %v109, %v479
    %v481 = vpop.f32.mrb[0].mxu0
    %482 = vmatprep.mubr.bf16.mxu0 0
    %483 = vmatmul.mubr.bf16.gmra.mrb[0].mxu0 %v151
    %v484 = vpop.f32.mrb[0].mxu0
    %v485 = vadd.f32 %v109, %v484
    %v486 = vpop.f32.mrb[0].mxu0
    %v487 = vpop.f32.mrb[0].mxu0
    %v488 = vadd.f32 %v109, %v487
    %v489 = vpop.f32.mrb[0].mxu0
    %490 = vmatprep.mubr.bf16.mxu0 0
    %491 = vmatmul.mubr.bf16.gmra.mrb[0].mxu0 %v152
    %v492 = vpop.f32.mrb[0].mxu0
    %v493 = vadd.f32 %v109, %v492
    %v494 = vpop.f32.mrb[0].mxu0
    %v495 = vpop.f32.mrb[0].mxu0
    %v496 = vadd.f32 %v109, %v495
    %v497 = vpop.f32.mrb[0].mxu0
    %498 = vdwg.mxu0
    %v499 = vpack.c.bf16 %v328, %v324
    %v500 = vpack.c.bf16 %v338, %v334
    %v501 = vpack.c.bf16 %v348, %v344
    %v502 = vpack.c.bf16 %v358, %v354
    %v503 = vpack.c.bf16 %v368, %v364
    %v504 = vpack.c.bf16 %v378, %v374
    %v505 = vpack.c.bf16 %v388, %v384
    %v506 = vpack.c.bf16 %v398, %v394
    %v515 = vunpack.c.l.b16 %v499
    %v516 = vunpack.c.h.b16 %v499
    %v517 = vunpack.c.l.b16 %v500
    %v518 = vunpack.c.h.b16 %v500
    %v519 = vunpack.c.l.b16 %v501
    %v520 = vunpack.c.h.b16 %v501
    %v521 = vunpack.c.l.b16 %v502
    %v522 = vunpack.c.h.b16 %v502
    %v523 = vunpack.c.l.b16 %v503
    %v524 = vunpack.c.h.b16 %v503
    %v525 = vunpack.c.l.b16 %v504
    %v526 = vunpack.c.h.b16 %v504
    %v527 = vunpack.c.l.b16 %v505
    %v528 = vunpack.c.h.b16 %v505
    %v529 = vunpack.c.l.b16 %v506
    %v530 = vunpack.c.h.b16 %v506
    %v531 = vpack.c.b16 %v515, %v515
    %v532 = vpack.c.b16 %v516, %v516
    %v533 = vpack.c.b16 %v517, %v517
    %v534 = vpack.c.b16 %v518, %v518
    %v535 = vpack.c.b16 %v519, %v519
    %v536 = vpack.c.b16 %v520, %v520
    %v537 = vpack.c.b16 %v521, %v521
    %v538 = vpack.c.b16 %v522, %v522
    %v539 = vpack.c.b16 %v523, %v523
    %v540 = vpack.c.b16 %v524, %v524
    %v541 = vpack.c.b16 %v525, %v525
    %v542 = vpack.c.b16 %v526, %v526
    %v543 = vpack.c.b16 %v527, %v527
    %v544 = vpack.c.b16 %v528, %v528
    %v545 = vpack.c.b16 %v529, %v529
    %v546 = vpack.c.b16 %v530, %v530
    %563 = vst [vmem:[#allocation7] sm:$0xf] %v531
    %564 = vst [vmem:[#allocation7 + $0x4] sm:$0xf] %v532
    %565 = vst [vmem:[#allocation7 + $0x8] sm:$0xf] %v533
    %566 = vst [vmem:[#allocation7 + $0xc] sm:$0xf] %v534
    %567 = vst [vmem:[#allocation7 + $0x10] sm:$0xf] %v535
    %568 = vst [vmem:[#allocation7 + $0x14] sm:$0xf] %v536
    %569 = vst [vmem:[#allocation7 + $0x18] sm:$0xf] %v537
    %570 = vst [vmem:[#allocation7 + $0x1c] sm:$0xf] %v538
    %571 = vst [vmem:[#allocation7 + $0x20] sm:$0xf] %v539
    %572 = vst [vmem:[#allocation7 + $0x24] sm:$0xf] %v540
    %573 = vst [vmem:[#allocation7 + $0x28] sm:$0xf] %v541
    %574 = vst [vmem:[#allocation7 + $0x2c] sm:$0xf] %v542
    %575 = vst [vmem:[#allocation7 + $0x30] sm:$0xf] %v543
    %576 = vst [vmem:[#allocation7 + $0x34] sm:$0xf] %v544
    %577 = vst [vmem:[#allocation7 + $0x38] sm:$0xf] %v545
    %578 = vst [vmem:[#allocation7 + $0x3c] sm:$0xf] %v546
    %v579 = vpack.c.bf16 %v330, %v326
    %v580 = vpack.c.bf16 %v340, %v336
    %v581 = vpack.c.bf16 %v350, %v346
    %v582 = vpack.c.bf16 %v360, %v356
    %v583 = vpack.c.bf16 %v370, %v366
    %v584 = vpack.c.bf16 %v380, %v376
    %v585 = vpack.c.bf16 %v390, %v386
    %v586 = vpack.c.bf16 %v400, %v396
    %v595 = vunpack.c.l.b16 %v579
    %v596 = vunpack.c.h.b16 %v579
    %v597 = vunpack.c.l.b16 %v580
    %v598 = vunpack.c.h.b16 %v580
    %v599 = vunpack.c.l.b16 %v581
    %v600 = vunpack.c.h.b16 %v581
    %v601 = vunpack.c.l.b16 %v582
    %v602 = vunpack.c.h.b16 %v582
    %v603 = vunpack.c.l.b16 %v583
    %v604 = vunpack.c.h.b16 %v583
    %v605 = vunpack.c.l.b16 %v584
    %v606 = vunpack.c.h.b16 %v584
    %v607 = vunpack.c.l.b16 %v585
    %v608 = vunpack.c.h.b16 %v585
    %v609 = vunpack.c.l.b16 %v586
    %v610 = vunpack.c.h.b16 %v586
    %v611 = vpack.c.b16 %v595, %v595
    %v612 = vpack.c.b16 %v596, %v596
    %v613 = vpack.c.b16 %v597, %v597
    %v614 = vpack.c.b16 %v598, %v598
    %v615 = vpack.c.b16 %v599, %v599
    %v616 = vpack.c.b16 %v600, %v600
    %v617 = vpack.c.b16 %v601, %v601
    %v618 = vpack.c.b16 %v602, %v602
    %v619 = vpack.c.b16 %v603, %v603
    %v620 = vpack.c.b16 %v604, %v604
    %v621 = vpack.c.b16 %v605, %v605
    %v622 = vpack.c.b16 %v606, %v606
    %v623 = vpack.c.b16 %v607, %v607
    %v624 = vpack.c.b16 %v608, %v608
    %v625 = vpack.c.b16 %v609, %v609
    %v626 = vpack.c.b16 %v610, %v610
    %643 = vst [vmem:[#allocation8] sm:$0xf] %v611
    %644 = vst [vmem:[#allocation8 + $0x4] sm:$0xf] %v612
    %645 = vst [vmem:[#allocation8 + $0x8] sm:$0xf] %v613
    %646 = vst [vmem:[#allocation8 + $0xc] sm:$0xf] %v614
    %647 = vst [vmem:[#allocation8 + $0x10] sm:$0xf] %v615
    %648 = vst [vmem:[#allocation8 + $0x14] sm:$0xf] %v616
    %649 = vst [vmem:[#allocation8 + $0x18] sm:$0xf] %v617
    %650 = vst [vmem:[#allocation8 + $0x1c] sm:$0xf] %v618
    %651 = vst [vmem:[#allocation8 + $0x20] sm:$0xf] %v619
    %652 = vst [vmem:[#allocation8 + $0x24] sm:$0xf] %v620
    %653 = vst [vmem:[#allocation8 + $0x28] sm:$0xf] %v621
    %654 = vst [vmem:[#allocation8 + $0x2c] sm:$0xf] %v622
    %655 = vst [vmem:[#allocation8 + $0x30] sm:$0xf] %v623
    %656 = vst [vmem:[#allocation8 + $0x34] sm:$0xf] %v624
    %657 = vst [vmem:[#allocation8 + $0x38] sm:$0xf] %v625
    %658 = vst [vmem:[#allocation8 + $0x3c] sm:$0xf] %v626
    %v659 = vpack.c.bf16 %v440, %v437
    %v660 = vpack.c.bf16 %v448, %v445
    %v661 = vpack.c.bf16 %v456, %v453
    %v662 = vpack.c.bf16 %v464, %v461
    %v663 = vpack.c.bf16 %v472, %v469
    %v664 = vpack.c.bf16 %v480, %v477
    %v665 = vpack.c.bf16 %v488, %v485
    %v666 = vpack.c.bf16 %v496, %v493
    %v675 = vunpack.c.l.b16 %v659
    %v676 = vunpack.c.h.b16 %v659
    %v677 = vunpack.c.l.b16 %v660
    %v678 = vunpack.c.h.b16 %v660
    %v679 = vunpack.c.l.b16 %v661
    %v680 = vunpack.c.h.b16 %v661
    %v681 = vunpack.c.l.b16 %v662
    %v682 = vunpack.c.h.b16 %v662
    %v683 = vunpack.c.l.b16 %v663
    %v684 = vunpack.c.h.b16 %v663
    %v685 = vunpack.c.l.b16 %v664
    %v686 = vunpack.c.h.b16 %v664
    %v687 = vunpack.c.l.b16 %v665
    %v688 = vunpack.c.h.b16 %v665
    %v689 = vunpack.c.l.b16 %v666
    %v690 = vunpack.c.h.b16 %v666
    %v691 = vpack.c.b16 %v675, %v675
    %v692 = vpack.c.b16 %v676, %v676
    %v693 = vpack.c.b16 %v677, %v677
    %v694 = vpack.c.b16 %v678, %v678
    %v695 = vpack.c.b16 %v679, %v679
    %v696 = vpack.c.b16 %v680, %v680
    %v697 = vpack.c.b16 %v681, %v681
    %v698 = vpack.c.b16 %v682, %v682
    %v699 = vpack.c.b16 %v683, %v683
    %v700 = vpack.c.b16 %v684, %v684
    %v701 = vpack.c.b16 %v685, %v685
    %v702 = vpack.c.b16 %v686, %v686
    %v703 = vpack.c.b16 %v687, %v687
    %v704 = vpack.c.b16 %v688, %v688
    %v705 = vpack.c.b16 %v689, %v689
    %v706 = vpack.c.b16 %v690, %v690
    %723 = vst [vmem:[#allocation10] sm:$0xf] %v691
    %724 = vst [vmem:[#allocation10 + $0x4] sm:$0xf] %v692
    %725 = vst [vmem:[#allocation10 + $0x8] sm:$0xf] %v693
    %726 = vst [vmem:[#allocation10 + $0xc] sm:$0xf] %v694
    %727 = vst [vmem:[#allocation10 + $0x10] sm:$0xf] %v695
    %728 = vst [vmem:[#allocation10 + $0x14] sm:$0xf] %v696
    %729 = vst [vmem:[#allocation10 + $0x18] sm:$0xf] %v697
    %730 = vst [vmem:[#allocation10 + $0x1c] sm:$0xf] %v698
    %731 = vst [vmem:[#allocation10 + $0x20] sm:$0xf] %v699
    %732 = vst [vmem:[#allocation10 + $0x24] sm:$0xf] %v700
    %733 = vst [vmem:[#allocation10 + $0x28] sm:$0xf] %v701
    %734 = vst [vmem:[#allocation10 + $0x2c] sm:$0xf] %v702
    %735 = vst [vmem:[#allocation10 + $0x30] sm:$0xf] %v703
    %736 = vst [vmem:[#allocation10 + $0x34] sm:$0xf] %v704
    %737 = vst [vmem:[#allocation10 + $0x38] sm:$0xf] %v705
    %738 = vst [vmem:[#allocation10 + $0x3c] sm:$0xf] %v706
    // Predicated region
    $region22: #{tpu_custom_call.1} parent=1 // pred_check
      _
    $region23: #{tpu_custom_call.1} parent=1 // pred_check_branch
      %740 = sbr.rel (0) target = $region25
    $region24: #{tpu_custom_call.1} parent=1 // pred_region
      %s742 = ssub.s32 1024, 1024
      %743 = vsyncadd [#allocation4], %s742
      %s744 = sshll.u32 [#allocation7], 4
      %s745 = int_to_ptr.vmem [resolvable:$true] %s744
      %750 = dma.vmem_to_hbm [thread:$0]  %s745, 1024, %s3, [#allocation4], 64, 64, 4
    $region25: #{tpu_custom_call.1} parent=1 // pred_fallthru
      _
    // Predicated region
    $region26: #{tpu_custom_call.1} parent=1 // pred_check
      _
    $region27: #{tpu_custom_call.1} parent=1 // pred_check_branch
      %752 = sbr.rel (0) target = $region29
    $region28: #{tpu_custom_call.1} parent=1 // pred_region
      %s754 = ssub.s32 1024, 1024
      %755 = vsyncadd [#allocation9], %s754
      %s756 = sshll.u32 [#allocation8], 4
      %s757 = int_to_ptr.vmem [resolvable:$true] %s756
      %762 = dma.vmem_to_hbm [thread:$0]  %s757, 1024, %s4, [#allocation9], 64, 64, 4
    $region29: #{tpu_custom_call.1} parent=1 // pred_fallthru
      _
    // Predicated region
    $region30: #{tpu_custom_call.1} parent=1 // pred_check
      _
    $region31: #{tpu_custom_call.1} parent=1 // pred_check_branch
      %764 = sbr.rel (0) target = $region33
    $region32: #{tpu_custom_call.1} parent=1 // pred_region
      %s766 = ssub.s32 1024, 1024
      %767 = vsyncadd [#allocation9], %s766
      %s768 = sshll.u32 [#allocation10], 4
      %s769 = int_to_ptr.vmem [resolvable:$true] %s768
      %774 = dma.vmem_to_hbm [thread:$0]  %s769, 1024, %s5, [#allocation9], 64, 64, 4
    $region33: #{tpu_custom_call.1} parent=1 // pred_fallthru
      _
    // Predicated region
    $region34: #{tpu_custom_call.1} parent=1 // pred_check
      _
    $region35: #{tpu_custom_call.1} parent=1 // pred_check_branch
      %776 = sbr.rel (0) target = $region37
    $region36: #{tpu_custom_call.1} parent=1 // pred_region
      %777 = dma.done [#allocation4], 1024
    $region37: #{tpu_custom_call.1} parent=1 // pred_fallthru
      _
    // Predicated region
    $region38: #{tpu_custom_call.1} parent=1 // pred_check
      _
    $region39: #{tpu_custom_call.1} parent=1 // pred_check_branch
      %779 = sbr.rel (0) target = $region41
    $region40: #{tpu_custom_call.1} parent=1 // pred_region
      %780 = dma.done [#allocation9], 1024
    $region41: #{tpu_custom_call.1} parent=1 // pred_fallthru
      _
    // Predicated region
    $region42: #{tpu_custom_call.1} parent=1 // pred_check
      _
    $region43: #{tpu_custom_call.1} parent=1 // pred_check_branch
      %782 = sbr.rel (0) target = $region45
    $region44: #{tpu_custom_call.1} parent=1 // pred_region
      %783 = dma.done [#allocation9], 1024
    $region45: #{tpu_custom_call.1} parent=1 // pred_fallthru
      _
    %784 = vsyncpa [#allocation3], 1
    %785 = vsyncpa [#allocation6], 1
    %786 = vsyncpa [#allocation4], 1
    %787 = vsyncpa [#allocation9], 1

</llo_original>
